<compile_context>
chip_gen: v6e
topology: v6e:2x2x1
jax: 0.10.0
libtpu: 0.0.40
codegen_flags: <defaults>
</compile_context>

<pallas_src>
import functools

import jax
import jax.numpy as jnp
from jax.experimental import pallas as pl
from jax.experimental.pallas import tpu as pltpu


LANE = 128


def _round_up(x, m):
    return ((x + m - 1) // m) * m


def _pad2(x, rows, cols):
    r, c = x.shape
    return jnp.pad(x, ((0, rows - r), (0, cols - c)))


def _pick_tile(n_pad):
    for t in (512, 256, 128):
        if n_pad % t == 0:
            return t
    return n_pad


# ----------------------------- Pallas kernel --------------------------------
def _sage_layer_kernel(a_ref, xk_ref, xi_ref, wn_ref, wr_ref, b_ref,
                       o_ref, acc_ref, *, apply_relu, apply_log_softmax,
                       out_valid):
    """One fused SAGEConv layer tile: rows i, reduction over source tiles k.

      k == 0    : acc = X_i @ W_root + b          (bias folded into acc init)
      every k   : acc += A_mean[i, k] @ (X_k @ W_nbr)
      k == last : out = relu(acc) | log_softmax(acc) masked to valid lanes
    """
    k = pl.program_id(1)

    @pl.when(k == 0)
    def _init():
        root = jnp.dot(xi_ref[...], wr_ref[...],
                       preferred_element_type=jnp.float32)
        acc_ref[...] = root + b_ref[...]

    xw = jnp.dot(xk_ref[...], wn_ref[...], preferred_element_type=jnp.float32)
    acc_ref[...] += jnp.dot(a_ref[...], xw.astype(a_ref.dtype),
                            preferred_element_type=jnp.float32)

    @pl.when(k == pl.num_programs(1) - 1)
    def _finalize():
        out = acc_ref[...]
        if apply_relu:
            out = jnp.maximum(out, 0.0)
        if apply_log_softmax:
            col = jax.lax.broadcasted_iota(jnp.int32, out.shape, 1)
            valid = col < out_valid
            masked = jnp.where(valid, out, -jnp.inf)
            m = jnp.max(masked, axis=-1, keepdims=True)
            e = jnp.where(valid, jnp.exp(out - m), 0.0)
            lse = m + jnp.log(jnp.sum(e, axis=-1, keepdims=True))
            out = out - lse
        o_ref[...] = out.astype(o_ref.dtype)


def sage_layer(a_pad, x_pad, w_nbr, w_root, b, *, apply_relu,
               apply_log_softmax, out_valid):
    """Fused SAGEConv layer over padded operands. Returns (n_pad, dout_p) f32."""
    n_pad = a_pad.shape[0]
    din_p = x_pad.shape[1]
    dout_p = w_nbr.shape[1]
    tm = tk = _pick_tile(n_pad)
    m_t, k_t = n_pad // tm, n_pad // tk

    kernel = functools.partial(
        _sage_layer_kernel,
        apply_relu=apply_relu,
        apply_log_softmax=apply_log_softmax,
        out_valid=out_valid,
    )

    bf, f32 = 2, 4
    tile_bytes = (tm * tk * bf + tk * din_p * bf + tm * din_p * bf
                  + 2 * din_p * dout_p * bf + dout_p * f32 + tm * dout_p * f32)
    # 2x for double-buffering of input/output tiles + accumulator + headroom,
    # clamped to v7x's 64 MiB physical VMEM.
    vmem_limit = int(min(64 << 20,
                         max(2 * tile_bytes + tm * dout_p * f32 + (2 << 20),
                             8 << 20)))

    flops = (m_t * k_t * (2 * tk * din_p * dout_p + 2 * tm * tk * dout_p)
             + m_t * 2 * tm * din_p * dout_p)
    transcendentals = n_pad * dout_p if apply_log_softmax else 0
    bytes_accessed = (n_pad * n_pad * bf + (m_t + 1) * n_pad * din_p * bf
                      + 2 * din_p * dout_p * bf + dout_p * f32
                      + n_pad * dout_p * f32)

    return pl.pallas_call(
        kernel,
        out_shape=jax.ShapeDtypeStruct((n_pad, dout_p), jnp.float32),
        grid_spec=pltpu.PrefetchScalarGridSpec(
            num_scalar_prefetch=0,
            grid=(m_t, k_t),
            in_specs=[
                pl.BlockSpec((tm, tk), lambda i, k: (i, k)),         # A_mean tile
                pl.BlockSpec((tk, din_p), lambda i, k: (k, 0)),      # X[k] (neighbors)
                pl.BlockSpec((tm, din_p), lambda i, k: (i, 0)),      # X[i] (root)
                pl.BlockSpec((din_p, dout_p), lambda i, k: (0, 0)),  # W_nbr (resident)
                pl.BlockSpec((din_p, dout_p), lambda i, k: (0, 0)),  # W_root (resident)
                pl.BlockSpec((1, dout_p), lambda i, k: (0, 0)),      # bias
            ],
            out_specs=pl.BlockSpec((tm, dout_p), lambda i, k: (i, 0)),
            scratch_shapes=[pltpu.VMEM((tm, dout_p), jnp.float32)],
        ),
        compiler_params=pltpu.CompilerParams(
            dimension_semantics=("parallel", "arbitrary"),
            vmem_limit_bytes=vmem_limit,
        ),
        cost_estimate=pl.CostEstimate(
            flops=int(flops),
            transcendentals=int(transcendentals),
            bytes_accessed=int(bytes_accessed),
        ),
    )(a_pad, x_pad, x_pad, w_nbr, w_root, b)


# ------------------------------- JAX glue ------------------------------------
def build_mean_adjacency(edge_index, num_nodes):
    """Dense mean-aggregation operator matching matmul(adj_t, x, reduce='mean').

    edge_index: (2, E) int array [source, target].
    Returns A with A[i, j] = 1/deg_in(i) for each edge j -> i (0 rows for
    isolated nodes). No self-loops are injected (SAGEConv does not add them).
    """
    src, dst = edge_index[0], edge_index[1]
    ones = jnp.ones(src.shape, dtype=jnp.float32)
    a = jnp.zeros((num_nodes, num_nodes), jnp.float32).at[dst, src].add(ones)
    deg = jnp.sum(a, axis=1, keepdims=True)
    return a / jnp.maximum(deg, 1.0)


def init_sage_params(key, num_layers, in_dim, hidden_dim, out_dim):
    """Per layer: (W_nbr, W_root, b) with glorot-uniform weights, zero bias."""
    dims = [in_dim] + [hidden_dim] * (num_layers - 1) + [out_dim]
    params = []
    for i in range(num_layers):
        key, k_nbr, k_root = jax.random.split(key, 3)
        fan_in, fan_out = dims[i], dims[i + 1]
        limit = (6.0 / (fan_in + fan_out)) ** 0.5
        w_nbr = jax.random.uniform(k_nbr, (fan_in, fan_out), jnp.float32,
                                   minval=-limit, maxval=limit)
        w_root = jax.random.uniform(k_root, (fan_in, fan_out), jnp.float32,
                                    minval=-limit, maxval=limit)
        b = jnp.zeros((1, fan_out), jnp.float32)
        params.append((w_nbr, w_root, b))
    return params


def adjsage_forward(x, edge_index, params):
    """Eval-mode AdjSAGE forward: SAGEConv stack + ReLU + final log_softmax."""
    n, din = x.shape
    num_classes = params[-1][0].shape[1]
    num_layers = len(params)

    a = build_mean_adjacency(edge_index, n)
    n_pad = _round_up(n, LANE)
    a_pad = _pad2(a, n_pad, n_pad).astype(jnp.bfloat16)

    x_pad = _pad2(x, n_pad, _round_up(din, LANE))
    for i, (w_nbr, w_root, b) in enumerate(params):
        d_in, d_out = w_nbr.shape
        din_p, dout_p = _round_up(d_in, LANE), _round_up(d_out, LANE)
        x_pad = _pad2(x_pad, n_pad, din_p)  # no-op when already padded
        x_pad = sage_layer(
            a_pad,
            x_pad.astype(jnp.bfloat16),
            _pad2(w_nbr, din_p, dout_p).astype(jnp.bfloat16),
            _pad2(w_root, din_p, dout_p).astype(jnp.bfloat16),
            _pad2(b, 1, dout_p),
            apply_relu=(i != num_layers - 1),
            apply_log_softmax=(i == num_layers - 1),
            out_valid=d_out,
        )
        # TODO(synk): training-mode dropout between layers is identity in eval
        # (training=False) and is not implemented as a kernel.
    return x_pad[:n, :num_classes]


# --------------------------------- main ---------------------------------------
if __name__ == "__main__":
    num_layers = 2
    in_channels = 8
    hidden_channels = 32
    out_channels = 4
    num_nodes = 16

    key = jax.random.PRNGKey(0)
    k_x, k_p = jax.random.split(key)

    # Deterministic small graph: bidirectional ring over 16 nodes (E = 32).
    src = jnp.arange(num_nodes, dtype=jnp.int32)
    dst = (src + 1) % num_nodes
    edge_index = jnp.stack(
        [jnp.concatenate([src, dst]), jnp.concatenate([dst, src])], axis=0
    )

    x = jax.random.normal(k_x, (num_nodes, in_channels), dtype=jnp.float32)
    params = init_sage_params(
        k_p, num_layers, in_channels, hidden_channels, out_channels
    )

    out = adjsage_forward(x, edge_index, params)
    out = jax.block_until_ready(out)

    assert out.shape == (num_nodes, out_channels), out.shape
    assert bool(jnp.all(jnp.isfinite(out)))
    # log_softmax rows must exponentiate-sum to 1.
    row_sums = jnp.exp(out).sum(axis=-1)
    assert bool(jnp.allclose(row_sums, 1.0, atol=1e-3)), row_sums
    print("KERNEL_OK")
</pallas_src>

<mosaic_0001>
module attributes {stable_mosaic.version = 11 : i64} {
  func.func @_sage_layer_kernel(%arg0: i32, %arg1: i32, %arg2: memref<128x128xbf16, #tpu.memory_space<vmem>>, %arg3: memref<128x128xbf16, #tpu.memory_space<vmem>>, %arg4: memref<128x128xbf16, #tpu.memory_space<vmem>>, %arg5: memref<128x128xbf16, #tpu.memory_space<vmem>>, %arg6: memref<128x128xbf16, #tpu.memory_space<vmem>>, %arg7: memref<1x128xf32, #tpu.memory_space<vmem>>, %arg8: memref<128x128xf32, #tpu.memory_space<vmem>>, %arg9: memref<128x128xf32, #tpu.memory_space<vmem>>) attributes {dimension_semantics = [#tpu.dimension_semantics<parallel>, #tpu.dimension_semantics<arbitrary>], iteration_bounds = array<i64: 1, 1>, scalar_prefetch = 0 : i64, scratch_operands = 1 : i64, tpu.core_type = #tpu.core_type<tc>, window_params = [{transform_indices = @transform_0, window_bounds = array<i64: 128, 128>}, {transform_indices = @transform_1, window_bounds = array<i64: 128, 128>}, {transform_indices = @transform_2, window_bounds = array<i64: 128, 128>}, {pipeline_mode = #tpu.pipeline_mode<synchronous>, transform_indices = @transform_3, window_bounds = array<i64: 128, 128>}, {pipeline_mode = #tpu.pipeline_mode<synchronous>, transform_indices = @transform_4, window_bounds = array<i64: 128, 128>}, {pipeline_mode = #tpu.pipeline_mode<synchronous>, transform_indices = @transform_5, window_bounds = array<i64: 1, 128>}, {transform_indices = @transform_6, window_bounds = array<i64: 128, 128>}]} {
    %c0_i32 = arith.constant 0 : i32
    %0 = arith.cmpi eq, %arg1, %c0_i32 : i32
    %1 = arith.extui %0 : i1 to i32
    %c0_i32_0 = arith.constant 0 : i32
    %2 = arith.cmpi ne, %1, %c0_i32_0 : i32
    scf.if %2 {
      %c0_13 = arith.constant 0 : index
      %c0_14 = arith.constant 0 : index
      %15 = vector.load %arg4[%c0_13, %c0_14] : memref<128x128xbf16, #tpu.memory_space<vmem>>, vector<128x128xbf16>
      %c0_15 = arith.constant 0 : index
      %c0_16 = arith.constant 0 : index
      %16 = vector.load %arg6[%c0_15, %c0_16] : memref<128x128xbf16, #tpu.memory_space<vmem>>, vector<128x128xbf16>
      %cst_17 = arith.constant dense<0.000000e+00> : vector<128x128xf32>
      %17 = tpu.matmul %15, %16, %cst_17 {dimension_numbers = #tpu.dot_dimension_numbers<[1], [0], [0], [1], [0, 0, 1, 1], [], []>} : vector<128x128xbf16>, vector<128x128xbf16>, vector<128x128xf32> -> vector<128x128xf32>
      %c0_18 = arith.constant 0 : index
      %c0_19 = arith.constant 0 : index
      %18 = vector.load %arg7[%c0_18, %c0_19] : memref<1x128xf32, #tpu.memory_space<vmem>>, vector<1x128xf32>
      %19 = vector.broadcast %18 : vector<1x128xf32> to vector<128x128xf32>
      %20 = arith.addf %17, %19 : vector<128x128xf32>
      %c0_20 = arith.constant 0 : index
      %c0_21 = arith.constant 0 : index
      %21 = vector.load %arg9[%c0_20, %c0_21] : memref<128x128xf32, #tpu.memory_space<vmem>>, vector<128x128xf32>
      tpu.vector_store %arg9[%c0_20, %c0_21], %20 {strides = array<i32>} : memref<128x128xf32, #tpu.memory_space<vmem>>, vector<128x128xf32>,
    } else {
    }
    %c0 = arith.constant 0 : index
    %c0_1 = arith.constant 0 : index
    %3 = vector.load %arg3[%c0, %c0_1] : memref<128x128xbf16, #tpu.memory_space<vmem>>, vector<128x128xbf16>
    %c0_2 = arith.constant 0 : index
    %c0_3 = arith.constant 0 : index
    %4 = vector.load %arg5[%c0_2, %c0_3] : memref<128x128xbf16, #tpu.memory_space<vmem>>, vector<128x128xbf16>
    %cst = arith.constant dense<0.000000e+00> : vector<128x128xf32>
    %5 = tpu.matmul %3, %4, %cst {dimension_numbers = #tpu.dot_dimension_numbers<[1], [0], [0], [1], [0, 0, 1, 1], [], []>} : vector<128x128xbf16>, vector<128x128xbf16>, vector<128x128xf32> -> vector<128x128xf32>
    %c0_4 = arith.constant 0 : index
    %c0_5 = arith.constant 0 : index
    %6 = vector.load %arg9[%c0_4, %c0_5] : memref<128x128xf32, #tpu.memory_space<vmem>>, vector<128x128xf32>
    %c0_6 = arith.constant 0 : index
    %c0_7 = arith.constant 0 : index
    %7 = vector.load %arg2[%c0_6, %c0_7] : memref<128x128xbf16, #tpu.memory_space<vmem>>, vector<128x128xbf16>
    %8 = arith.truncf %5 : vector<128x128xf32> to vector<128x128xbf16>
    %cst_8 = arith.constant dense<0.000000e+00> : vector<128x128xf32>
    %9 = tpu.matmul %7, %8, %cst_8 {dimension_numbers = #tpu.dot_dimension_numbers<[1], [0], [0], [1], [0, 0, 1, 1], [], []>} : vector<128x128xbf16>, vector<128x128xbf16>, vector<128x128xf32> -> vector<128x128xf32>
    %10 = arith.addf %6, %9 : vector<128x128xf32>
    %c0_9 = arith.constant 0 : index
    %c0_10 = arith.constant 0 : index
    %11 = vector.load %arg9[%c0_9, %c0_10] : memref<128x128xf32, #tpu.memory_space<vmem>>, vector<128x128xf32>
    tpu.vector_store %arg9[%c0_9, %c0_10], %10 {strides = array<i32>} : memref<128x128xf32, #tpu.memory_space<vmem>>, vector<128x128xf32>,
    %c0_i32_11 = arith.constant 0 : i32
    %12 = arith.cmpi eq, %arg1, %c0_i32_11 : i32
    %13 = arith.extui %12 : i1 to i32
    %c0_i32_12 = arith.constant 0 : i32
    %14 = arith.cmpi ne, %13, %c0_i32_12 : i32
    scf.if %14 {
      %c0_13 = arith.constant 0 : index
      %c0_14 = arith.constant 0 : index
      %15 = vector.load %arg9[%c0_13, %c0_14] : memref<128x128xf32, #tpu.memory_space<vmem>>, vector<128x128xf32>
      %cst_15 = arith.constant 0.000000e+00 : f32
      %16 = vector.broadcast %cst_15 : f32 to vector<128x128xf32>
      %17 = arith.maximumf %15, %16 : vector<128x128xf32>
      %c0_16 = arith.constant 0 : index
      %c0_17 = arith.constant 0 : index
      %18 = vector.load %arg8[%c0_16, %c0_17] : memref<128x128xf32, #tpu.memory_space<vmem>>, vector<128x128xf32>
      tpu.vector_store %arg8[%c0_16, %c0_17], %17 {strides = array<i32>} : memref<128x128xf32, #tpu.memory_space<vmem>>, vector<128x128xf32>,
    } else {
    }
    return
  }
  func.func @transform_0(%arg0: i32, %arg1: i32) -> (i32, i32) {
    %c0_i32 = arith.constant 0 : i32
    return %arg0, %arg1 : i32, i32
  }
  func.func @transform_1(%arg0: i32, %arg1: i32) -> (i32, i32) {
    %c0_i32 = arith.constant 0 : i32
    %c0_i32_0 = arith.constant 0 : i32
    return %arg1, %c0_i32 : i32, i32
  }
  func.func @transform_2(%arg0: i32, %arg1: i32) -> (i32, i32) {
    %c0_i32 = arith.constant 0 : i32
    %c0_i32_0 = arith.constant 0 : i32
    return %arg0, %c0_i32 : i32, i32
  }
  func.func @transform_3(%arg0: i32, %arg1: i32) -> (i32, i32) {
    %c0_i32 = arith.constant 0 : i32
    %c0_i32_0 = arith.constant 0 : i32
    %c0_i32_1 = arith.constant 0 : i32
    return %c0_i32, %c0_i32_0 : i32, i32
  }
  func.func @transform_4(%arg0: i32, %arg1: i32) -> (i32, i32) {
    %c0_i32 = arith.constant 0 : i32
    %c0_i32_0 = arith.constant 0 : i32
    %c0_i32_1 = arith.constant 0 : i32
    return %c0_i32, %c0_i32_0 : i32, i32
  }
  func.func @transform_5(%arg0: i32, %arg1: i32) -> (i32, i32) {
    %c0_i32 = arith.constant 0 : i32
    %c0_i32_0 = arith.constant 0 : i32
    %c0_i32_1 = arith.constant 0 : i32
    return %c0_i32, %c0_i32_0 : i32, i32
  }
  func.func @transform_6(%arg0: i32, %arg1: i32) -> (i32, i32) {
    %c0_i32 = arith.constant 0 : i32
    %c0_i32_0 = arith.constant 0 : i32
    return %arg0, %c0_i32 : i32, i32
  }
}

</mosaic_0001>

<llo_original>
// kernel: tpu_custom_call.1
$region0: #{tpu_custom_call.1}
  #allocation0 [shape = 'u32[]', space=smem, size = 0x4, offset = 0x4, fixed_abs, tag = 'smem constant byte address 0x4 - core index']
  #allocation1 [shape = 'u32[144,128]{1,0:T(1,128)}', space=vmem, size = 0x12000, scoped, tag = 'internal scratch']
  #allocation2 [shape = 'f32[128,128]{1,0:T(8,128)}', space=vmem, size = 0x10000, scoped, tag = 'scratch operand']
  %s0 = inlined_call_operand.hbm [shape: bf16[128,128], index: 0, kind: input, shape index: {}]
  %s1 = inlined_call_operand.hbm [shape: bf16[128,128], index: 1, kind: input, shape index: {}]
  %s2 = inlined_call_operand.hbm [shape: bf16[128,128], index: 2, kind: input, shape index: {}]
  %s3 = inlined_call_operand.hbm [shape: bf16[128,128], index: 3, kind: input, shape index: {}]
  %s4 = inlined_call_operand.hbm [shape: bf16[128,128], index: 4, kind: input, shape index: {}]
  %s5 = inlined_call_operand.vmem [shape: f32[1,128], index: 5, kind: input, shape index: {}]
  %s6 = inlined_call_operand.hbm [shape: f32[128,128], index: 6, kind: output, shape index: {}]
  %s7 = sld [smem:[#allocation0]]
  $region62: #{tpu_custom_call.1} parent=0
    _
  %s9 = ssub.s32 1, %s7
  %s10 = scalar_select 0, %s9, %s7
  $region1: #{tpu_custom_call.1} parent=0
    #allocation3 [shape = 'u8[32768]{0}', space=vmem, size = 0x8000, scoped, tag = 'input window, operand 0, single buffered']
    #allocation4 [shape = 's32[1]{0}', space=sflag, size = 0x4, scoped, tag = 'scoped memory for tpu_custom_call.1']
    #allocation5 [shape = 's32[1]{0}', space=sflag, size = 0x4, scoped, tag = 'scoped memory for tpu_custom_call.1']
    #allocation6 [shape = 'u8[32768]{0}', space=vmem, size = 0x8000, scoped, tag = 'input window, operand 1, single buffered']
    #allocation7 [shape = 's32[1]{0}', space=sflag, size = 0x4, scoped, tag = 'scoped memory for tpu_custom_call.1']
    #allocation8 [shape = 'u8[32768]{0}', space=vmem, size = 0x8000, scoped, tag = 'input window, operand 2, single buffered']
    #allocation9 [shape = 'u8[32768]{0}', space=vmem, size = 0x8000, scoped, tag = 'input window, operand 3, single buffered']
    #allocation10 [shape = 's32[1]{0}', space=sflag, size = 0x4, scoped, tag = 'scoped memory for tpu_custom_call.1']
    #allocation11 [shape = 'u8[32768]{0}', space=vmem, size = 0x8000, scoped, tag = 'input window, operand 4, single buffered']
    #allocation12 [shape = 'u8[65536]{0}', space=vmem, size = 0x10000, scoped, tag = 'output window, operand 0, single buffered']
    %11 = vsyncpa [#allocation4], 0
    %12 = vsyncpa [#allocation7], 0
    %13 = vsyncpa [#allocation10], 0
    %14 = vsyncpa [#allocation5], 0
    // Predicated region
    $region2: #{tpu_custom_call.1} parent=1 // pred_check
      _
    $region3: #{tpu_custom_call.1} parent=1 // pred_check_branch
      %16 = sbr.rel (0) target = $region5
    $region4: #{tpu_custom_call.1} parent=1 // pred_region
      %s18 = ssub.s32 1024, 1024
      %19 = vsyncadd [#allocation4], %s18
      %s20 = sshll.u32 [#allocation3], 4
      %s21 = int_to_ptr.vmem [resolvable:$true] %s20
      %26 = dma.hbm_to_vmem [thread:$0]  %s0, 1024, %s21, [#allocation4], 64, 64, 4
    $region5: #{tpu_custom_call.1} parent=1 // pred_fallthru
      _
    // Predicated region
    $region6: #{tpu_custom_call.1} parent=1 // pred_check
      _
    $region7: #{tpu_custom_call.1} parent=1 // pred_check_branch
      %28 = sbr.rel (0) target = $region9
    $region8: #{tpu_custom_call.1} parent=1 // pred_region
      %s30 = ssub.s32 1024, 1024
      %31 = vsyncadd [#allocation7], %s30
      %s32 = sshll.u32 [#allocation6], 4
      %s33 = int_to_ptr.vmem [resolvable:$true] %s32
      %38 = dma.hbm_to_vmem [thread:$0]  %s1, 1024, %s33, [#allocation7], 64, 64, 4
    $region9: #{tpu_custom_call.1} parent=1 // pred_fallthru
      _
    // Predicated region
    $region10: #{tpu_custom_call.1} parent=1 // pred_check
      _
    $region11: #{tpu_custom_call.1} parent=1 // pred_check_branch
      %40 = sbr.rel (0) target = $region13
    $region12: #{tpu_custom_call.1} parent=1 // pred_region
      %s42 = ssub.s32 1024, 1024
      %43 = vsyncadd [#allocation7], %s42
      %s44 = sshll.u32 [#allocation8], 4
      %s45 = int_to_ptr.vmem [resolvable:$true] %s44
      %50 = dma.hbm_to_vmem [thread:$0]  %s2, 1024, %s45, [#allocation7], 64, 64, 4
    $region13: #{tpu_custom_call.1} parent=1 // pred_fallthru
      _
    // Predicated region
    $region14: #{tpu_custom_call.1} parent=1 // pred_check
      _
    $region15: #{tpu_custom_call.1} parent=1 // pred_check_branch
      %52 = sbr.rel (0) target = $region17
    $region16: #{tpu_custom_call.1} parent=1 // pred_region
      %s54 = ssub.s32 1024, 1024
      %55 = vsyncadd [#allocation10], %s54
      %s56 = sshll.u32 [#allocation9], 4
      %s57 = int_to_ptr.vmem [resolvable:$true] %s56
      %62 = dma.hbm_to_vmem [thread:$0]  %s3, 1024, %s57, [#allocation10], 64, 64, 4
    $region17: #{tpu_custom_call.1} parent=1 // pred_fallthru
      _
    // Predicated region
    $region18: #{tpu_custom_call.1} parent=1 // pred_check
      _
    $region19: #{tpu_custom_call.1} parent=1 // pred_check_branch
      %64 = sbr.rel (0) target = $region21
    $region20: #{tpu_custom_call.1} parent=1 // pred_region
      %s66 = ssub.s32 1024, 1024
      %67 = vsyncadd [#allocation10], %s66
      %s68 = sshll.u32 [#allocation11], 4
      %s69 = int_to_ptr.vmem [resolvable:$true] %s68
      %74 = dma.hbm_to_vmem [thread:$0]  %s4, 1024, %s69, [#allocation10], 64, 64, 4
    $region21: #{tpu_custom_call.1} parent=1 // pred_fallthru
      _
    // Predicated region
    $region22: #{tpu_custom_call.1} parent=1 // pred_check
      _
    $region23: #{tpu_custom_call.1} parent=1 // pred_check_branch
      %76 = sbr.rel (0) target = $region25
    $region24: #{tpu_custom_call.1} parent=1 // pred_region
      _
    $region25: #{tpu_custom_call.1} parent=1 // pred_fallthru
      _
    // Predicated region
    $region26: #{tpu_custom_call.1} parent=1 // pred_check
      _
    $region27: #{tpu_custom_call.1} parent=1 // pred_check_branch
      %78 = sbr.rel (0) target = $region29
    $region28: #{tpu_custom_call.1} parent=1 // pred_region
      %79 = dma.done [#allocation4], 1024
    $region29: #{tpu_custom_call.1} parent=1 // pred_fallthru
      _
    // Predicated region
    $region30: #{tpu_custom_call.1} parent=1 // pred_check
      _
    $region31: #{tpu_custom_call.1} parent=1 // pred_check_branch
      %81 = sbr.rel (0) target = $region33
    $region32: #{tpu_custom_call.1} parent=1 // pred_region
      %82 = dma.done [#allocation7], 1024
    $region33: #{tpu_custom_call.1} parent=1 // pred_fallthru
      _
    // Predicated region
    $region34: #{tpu_custom_call.1} parent=1 // pred_check
      _
    $region35: #{tpu_custom_call.1} parent=1 // pred_check_branch
      %84 = sbr.rel (0) target = $region37
    $region36: #{tpu_custom_call.1} parent=1 // pred_region
      %85 = dma.done [#allocation7], 1024
    $region37: #{tpu_custom_call.1} parent=1 // pred_fallthru
      _
    // Predicated region
    $region38: #{tpu_custom_call.1} parent=1 // pred_check
      _
    $region39: #{tpu_custom_call.1} parent=1 // pred_check_branch
      %87 = sbr.rel (0) target = $region41
    $region40: #{tpu_custom_call.1} parent=1 // pred_region
      %88 = dma.done [#allocation10], 1024
    $region41: #{tpu_custom_call.1} parent=1 // pred_fallthru
      _
    // Predicated region
    $region42: #{tpu_custom_call.1} parent=1 // pred_check
      _
    $region43: #{tpu_custom_call.1} parent=1 // pred_check_branch
      %90 = sbr.rel (0) target = $region45
    $region44: #{tpu_custom_call.1} parent=1 // pred_region
      %91 = dma.done [#allocation10], 1024
    $region45: #{tpu_custom_call.1} parent=1 // pred_fallthru
      _
    %p93 = scmp.eq.s32.totalorder 0, 0
    // Predicated region
    $region46: #{tpu_custom_call.1} parent=1 // pred_check
      %p94 = pneg %p93
    $region47: #{tpu_custom_call.1} parent=1 // pred_check_branch
      %96 = sbr.rel (%p94) target = $region49
    $region48: #{tpu_custom_call.1} parent=1 // pred_region
      %v97 = vld [vmem:[#allocation8] sm:$0xf]
      %v98 = vld [vmem:[#allocation8 + $0x4] sm:$0xf]
      %v99 = vld [vmem:[#allocation8 + $0x8] sm:$0xf]
      %v100 = vld [vmem:[#allocation8 + $0xc] sm:$0xf]
      %v101 = vld [vmem:[#allocation8 + $0x10] sm:$0xf]
      %v102 = vld [vmem:[#allocation8 + $0x14] sm:$0xf]
      %v103 = vld [vmem:[#allocation8 + $0x18] sm:$0xf]
      %v104 = vld [vmem:[#allocation8 + $0x1c] sm:$0xf]
      %v105 = vld [vmem:[#allocation8 + $0x20] sm:$0xf]
      %v106 = vld [vmem:[#allocation8 + $0x24] sm:$0xf]
      %v107 = vld [vmem:[#allocation8 + $0x28] sm:$0xf]
      %v108 = vld [vmem:[#allocation8 + $0x2c] sm:$0xf]
      %v109 = vld [vmem:[#allocation8 + $0x30] sm:$0xf]
      %v110 = vld [vmem:[#allocation8 + $0x34] sm:$0xf]
      %v111 = vld [vmem:[#allocation8 + $0x38] sm:$0xf]
      %v112 = vld [vmem:[#allocation8 + $0x3c] sm:$0xf]
      %v113 = vld [vmem:[#allocation11] sm:$0xf]
      %v114 = vld [vmem:[#allocation11 + $0x4] sm:$0xf]
      %v115 = vld [vmem:[#allocation11 + $0x8] sm:$0xf]
      %v116 = vld [vmem:[#allocation11 + $0xc] sm:$0xf]
      %v117 = vld [vmem:[#allocation11 + $0x10] sm:$0xf]
      %v118 = vld [vmem:[#allocation11 + $0x14] sm:$0xf]
      %v119 = vld [vmem:[#allocation11 + $0x18] sm:$0xf]
      %v120 = vld [vmem:[#allocation11 + $0x1c] sm:$0xf]
      %v121 = vld [vmem:[#allocation11 + $0x20] sm:$0xf]
      %v122 = vld [vmem:[#allocation11 + $0x24] sm:$0xf]
      %v123 = vld [vmem:[#allocation11 + $0x28] sm:$0xf]
      %v124 = vld [vmem:[#allocation11 + $0x2c] sm:$0xf]
      %v125 = vld [vmem:[#allocation11 + $0x30] sm:$0xf]
      %v126 = vld [vmem:[#allocation11 + $0x34] sm:$0xf]
      %v127 = vld [vmem:[#allocation11 + $0x38] sm:$0xf]
      %v128 = vld [vmem:[#allocation11 + $0x3c] sm:$0xf]
      %v129 = vld [vmem:[%s5] sm:$0x1]
      %v131 = vlaneseq
      %v132 = vshrl.u32 %v131, 7
      %v133 = vsub.s32 0, %v132
      %v134 = vrot.slane %v129, %v133
      %v152 = vunpack.c.l.b16 %v97
      %v153 = vunpack.c.l.b16 %v98
      %v154 = vunpack.c.l.b16 %v99
      %v155 = vunpack.c.l.b16 %v100
      %v156 = vunpack.c.l.b16 %v101
      %v157 = vunpack.c.l.b16 %v102
      %v158 = vunpack.c.l.b16 %v103
      %v159 = vunpack.c.l.b16 %v104
      %v160 = vunpack.c.l.b16 %v105
      %v161 = vunpack.c.l.b16 %v106
      %v162 = vunpack.c.l.b16 %v107
      %v163 = vunpack.c.l.b16 %v108
      %v164 = vunpack.c.l.b16 %v109
      %v165 = vunpack.c.l.b16 %v110
      %v166 = vunpack.c.l.b16 %v111
      %v167 = vunpack.c.l.b16 %v112
      %v168 = vpack.c.b16 %v153, %v152
      %v169 = vpack.c.b16 %v155, %v154
      %v170 = vpack.c.b16 %v157, %v156
      %v171 = vpack.c.b16 %v159, %v158
      %v172 = vpack.c.b16 %v161, %v160
      %v173 = vpack.c.b16 %v163, %v162
      %v174 = vpack.c.b16 %v165, %v164
      %v175 = vpack.c.b16 %v167, %v166
      %v200 = vunpack.c.l.b16 %v113
      %v201 = vunpack.c.l.b16 %v114
      %v202 = vunpack.c.l.b16 %v115
      %v203 = vunpack.c.l.b16 %v116
      %v204 = vunpack.c.l.b16 %v117
      %v205 = vunpack.c.l.b16 %v118
      %v206 = vunpack.c.l.b16 %v119
      %v207 = vunpack.c.l.b16 %v120
      %v208 = vunpack.c.l.b16 %v121
      %v209 = vunpack.c.l.b16 %v122
      %v210 = vunpack.c.l.b16 %v123
      %v211 = vunpack.c.l.b16 %v124
      %v212 = vunpack.c.l.b16 %v125
      %v213 = vunpack.c.l.b16 %v126
      %v214 = vunpack.c.l.b16 %v127
      %v215 = vunpack.c.l.b16 %v128
      %v216 = vpack.c.b16 %v201, %v200
      %v217 = vpack.c.b16 %v203, %v202
      %v218 = vpack.c.b16 %v205, %v204
      %v219 = vpack.c.b16 %v207, %v206
      %v220 = vpack.c.b16 %v209, %v208
      %v221 = vpack.c.b16 %v211, %v210
      %v222 = vpack.c.b16 %v213, %v212
      %v223 = vpack.c.b16 %v215, %v214
      %232 = vmatprep.subr.bf16.mxu0 0
      %233 = vmatpush1.bf16.msra.mxu0 %v223
      %234 = vmatprep.subr.bf16.mxu0 0
      %235 = vmatpush1.bf16.msra.mxu0 %v222
      %236 = vmatprep.subr.bf16.mxu0 0
      %237 = vmatpush1.bf16.msra.mxu0 %v221
      %238 = vmatprep.subr.bf16.mxu0 0
      %239 = vmatpush1.bf16.msra.mxu0 %v220
      %240 = vmatprep.subr.bf16.mxu0 0
      %241 = vmatpush1.bf16.msra.mxu0 %v219
      %242 = vmatprep.subr.bf16.mxu0 0
      %243 = vmatpush1.bf16.msra.mxu0 %v218
      %244 = vmatprep.subr.bf16.mxu0 0
      %245 = vmatpush1.bf16.msra.mxu0 %v217
      %246 = vmatprep.subr.bf16.mxu0 0
      %247 = vmatpush1.bf16.msra.mxu0 %v216
      %248 = vmatprep.subr.bf16.mxu0 0
      %249 = vmatpush2.bf16.msra.mxu0 0
      %250 = vmatprep.subr.bf16.mxu0 0
      %251 = vmatpush2.bf16.msra.mxu0 0
      %252 = vmatprep.subr.bf16.mxu0 0
      %253 = vmatpush2.bf16.msra.mxu0 0
      %254 = vmatprep.subr.bf16.mxu0 0
      %255 = vmatpush2.bf16.msra.mxu0 0
      %256 = vmatprep.subr.bf16.mxu0 0
      %257 = vmatpush2.bf16.msra.mxu0 0
      %258 = vmatprep.subr.bf16.mxu0 0
      %259 = vmatpush2.bf16.msra.mxu0 0
      %260 = vmatprep.subr.bf16.mxu0 0
      %261 = vmatpush2.bf16.msra.mxu0 0
      %262 = vmatprep.subr.bf16.mxu0 0
      %263 = vmatpush2.bf16.msra.mxu0 0
      %264 = vmatprep.mubr.bf16.mxu0 0
      %265 = vmatmul.mubr.bf16.gmra.mxu0 %v168
      %v266 = vpop.f32.mrf.mxu0
      %v267 = vadd.f32 %v134, %v266
      %v268 = vpop.f32.mrf.mxu0
      %v269 = vpop.f32.mrf.mxu0
      %v270 = vadd.f32 %v134, %v269
      %v271 = vpop.f32.mrf.mxu0
      %272 = vmatprep.mubr.bf16.mxu0 0
      %273 = vmatmul.mubr.bf16.gmra.mxu0 %v169
      %v274 = vpop.f32.mrf.mxu0
      %v275 = vadd.f32 %v134, %v274
      %v276 = vpop.f32.mrf.mxu0
      %v277 = vpop.f32.mrf.mxu0
      %v278 = vadd.f32 %v134, %v277
      %v279 = vpop.f32.mrf.mxu0
      %280 = vmatprep.mubr.bf16.mxu0 0
      %281 = vmatmul.mubr.bf16.gmra.mxu0 %v170
      %v282 = vpop.f32.mrf.mxu0
      %v283 = vadd.f32 %v134, %v282
      %v284 = vpop.f32.mrf.mxu0
      %v285 = vpop.f32.mrf.mxu0
      %v286 = vadd.f32 %v134, %v285
      %v287 = vpop.f32.mrf.mxu0
      %288 = vmatprep.mubr.bf16.mxu0 0
      %289 = vmatmul.mubr.bf16.gmra.mxu0 %v171
      %v290 = vpop.f32.mrf.mxu0
      %v291 = vadd.f32 %v134, %v290
      %v292 = vpop.f32.mrf.mxu0
      %v293 = vpop.f32.mrf.mxu0
      %v294 = vadd.f32 %v134, %v293
      %v295 = vpop.f32.mrf.mxu0
      %296 = vmatprep.mubr.bf16.mxu0 0
      %297 = vmatmul.mubr.bf16.gmra.mxu0 %v172
      %v298 = vpop.f32.mrf.mxu0
      %v299 = vadd.f32 %v134, %v298
      %v300 = vpop.f32.mrf.mxu0
      %v301 = vpop.f32.mrf.mxu0
      %v302 = vadd.f32 %v134, %v301
      %v303 = vpop.f32.mrf.mxu0
      %304 = vmatprep.mubr.bf16.mxu0 0
      %305 = vmatmul.mubr.bf16.gmra.mxu0 %v173
      %v306 = vpop.f32.mrf.mxu0
      %v307 = vadd.f32 %v134, %v306
      %v308 = vpop.f32.mrf.mxu0
      %v309 = vpop.f32.mrf.mxu0
      %v310 = vadd.f32 %v134, %v309
      %v311 = vpop.f32.mrf.mxu0
      %312 = vmatprep.mubr.bf16.mxu0 0
      %313 = vmatmul.mubr.bf16.gmra.mxu0 %v174
      %v314 = vpop.f32.mrf.mxu0
      %v315 = vadd.f32 %v134, %v314
      %v316 = vpop.f32.mrf.mxu0
      %v317 = vpop.f32.mrf.mxu0
      %v318 = vadd.f32 %v134, %v317
      %v319 = vpop.f32.mrf.mxu0
      %320 = vmatprep.mubr.bf16.mxu0 0
      %321 = vmatmul.mubr.bf16.gmra.mxu0 %v175
      %v322 = vpop.f32.mrf.mxu0
      %v323 = vadd.f32 %v134, %v322
      %v324 = vpop.f32.mrf.mxu0
      %v325 = vpop.f32.mrf.mxu0
      %v326 = vadd.f32 %v134, %v325
      %v327 = vpop.f32.mrf.mxu0
      %328 = vdwg.mxu0
      %329 = vst [vmem:[#allocation2] sm:$0xff] %v267
      %330 = vst [vmem:[#allocation2 + $0x8] sm:$0xff] %v270
      %331 = vst [vmem:[#allocation2 + $0x10] sm:$0xff] %v275
      %332 = vst [vmem:[#allocation2 + $0x18] sm:$0xff] %v278
      %333 = vst [vmem:[#allocation2 + $0x20] sm:$0xff] %v283
      %334 = vst [vmem:[#allocation2 + $0x28] sm:$0xff] %v286
      %335 = vst [vmem:[#allocation2 + $0x30] sm:$0xff] %v291
      %336 = vst [vmem:[#allocation2 + $0x38] sm:$0xff] %v294
      %337 = vst [vmem:[#allocation2 + $0x40] sm:$0xff] %v299
      %338 = vst [vmem:[#allocation2 + $0x48] sm:$0xff] %v302
      %339 = vst [vmem:[#allocation2 + $0x50] sm:$0xff] %v307
      %340 = vst [vmem:[#allocation2 + $0x58] sm:$0xff] %v310
      %341 = vst [vmem:[#allocation2 + $0x60] sm:$0xff] %v315
      %342 = vst [vmem:[#allocation2 + $0x68] sm:$0xff] %v318
      %343 = vst [vmem:[#allocation2 + $0x70] sm:$0xff] %v323
      %344 = vst [vmem:[#allocation2 + $0x78] sm:$0xff] %v326
    $region49: #{tpu_custom_call.1} parent=1 // pred_fallthru
      _
    %v345 = vld [vmem:[#allocation6] sm:$0xf]
    %v346 = vld [vmem:[#allocation6 + $0x4] sm:$0xf]
    %v347 = vld [vmem:[#allocation6 + $0x8] sm:$0xf]
    %v348 = vld [vmem:[#allocation6 + $0xc] sm:$0xf]
    %v349 = vld [vmem:[#allocation6 + $0x10] sm:$0xf]
    %v350 = vld [vmem:[#allocation6 + $0x14] sm:$0xf]
    %v351 = vld [vmem:[#allocation6 + $0x18] sm:$0xf]
    %v352 = vld [vmem:[#allocation6 + $0x1c] sm:$0xf]
    %v353 = vld [vmem:[#allocation6 + $0x20] sm:$0xf]
    %v354 = vld [vmem:[#allocation6 + $0x24] sm:$0xf]
    %v355 = vld [vmem:[#allocation6 + $0x28] sm:$0xf]
    %v356 = vld [vmem:[#allocation6 + $0x2c] sm:$0xf]
    %v357 = vld [vmem:[#allocation6 + $0x30] sm:$0xf]
    %v358 = vld [vmem:[#allocation6 + $0x34] sm:$0xf]
    %v359 = vld [vmem:[#allocation6 + $0x38] sm:$0xf]
    %v360 = vld [vmem:[#allocation6 + $0x3c] sm:$0xf]
    %v361 = vld [vmem:[#allocation9] sm:$0xf]
    %v362 = vld [vmem:[#allocation9 + $0x4] sm:$0xf]
    %v363 = vld [vmem:[#allocation9 + $0x8] sm:$0xf]
    %v364 = vld [vmem:[#allocation9 + $0xc] sm:$0xf]
    %v365 = vld [vmem:[#allocation9 + $0x10] sm:$0xf]
    %v366 = vld [vmem:[#allocation9 + $0x14] sm:$0xf]
    %v367 = vld [vmem:[#allocation9 + $0x18] sm:$0xf]
    %v368 = vld [vmem:[#allocation9 + $0x1c] sm:$0xf]
    %v369 = vld [vmem:[#allocation9 + $0x20] sm:$0xf]
    %v370 = vld [vmem:[#allocation9 + $0x24] sm:$0xf]
    %v371 = vld [vmem:[#allocation9 + $0x28] sm:$0xf]
    %v372 = vld [vmem:[#allocation9 + $0x2c] sm:$0xf]
    %v373 = vld [vmem:[#allocation9 + $0x30] sm:$0xf]
    %v374 = vld [vmem:[#allocation9 + $0x34] sm:$0xf]
    %v375 = vld [vmem:[#allocation9 + $0x38] sm:$0xf]
    %v376 = vld [vmem:[#allocation9 + $0x3c] sm:$0xf]
    %v393 = vunpack.c.l.b16 %v345
    %v394 = vunpack.c.l.b16 %v346
    %v395 = vunpack.c.l.b16 %v347
    %v396 = vunpack.c.l.b16 %v348
    %v397 = vunpack.c.l.b16 %v349
    %v398 = vunpack.c.l.b16 %v350
    %v399 = vunpack.c.l.b16 %v351
    %v400 = vunpack.c.l.b16 %v352
    %v401 = vunpack.c.l.b16 %v353
    %v402 = vunpack.c.l.b16 %v354
    %v403 = vunpack.c.l.b16 %v355
    %v404 = vunpack.c.l.b16 %v356
    %v405 = vunpack.c.l.b16 %v357
    %v406 = vunpack.c.l.b16 %v358
    %v407 = vunpack.c.l.b16 %v359
    %v408 = vunpack.c.l.b16 %v360
    %v409 = vpack.c.b16 %v394, %v393
    %v410 = vpack.c.b16 %v396, %v395
    %v411 = vpack.c.b16 %v398, %v397
    %v412 = vpack.c.b16 %v400, %v399
    %v413 = vpack.c.b16 %v402, %v401
    %v414 = vpack.c.b16 %v404, %v403
    %v415 = vpack.c.b16 %v406, %v405
    %v416 = vpack.c.b16 %v408, %v407
    %v441 = vunpack.c.l.b16 %v361
    %v442 = vunpack.c.l.b16 %v362
    %v443 = vunpack.c.l.b16 %v363
    %v444 = vunpack.c.l.b16 %v364
    %v445 = vunpack.c.l.b16 %v365
    %v446 = vunpack.c.l.b16 %v366
    %v447 = vunpack.c.l.b16 %v367
    %v448 = vunpack.c.l.b16 %v368
    %v449 = vunpack.c.l.b16 %v369
    %v450 = vunpack.c.l.b16 %v370
    %v451 = vunpack.c.l.b16 %v371
    %v452 = vunpack.c.l.b16 %v372
    %v453 = vunpack.c.l.b16 %v373
    %v454 = vunpack.c.l.b16 %v374
    %v455 = vunpack.c.l.b16 %v375
    %v456 = vunpack.c.l.b16 %v376
    %v457 = vpack.c.b16 %v442, %v441
    %v458 = vpack.c.b16 %v444, %v443
    %v459 = vpack.c.b16 %v446, %v445
    %v460 = vpack.c.b16 %v448, %v447
    %v461 = vpack.c.b16 %v450, %v449
    %v462 = vpack.c.b16 %v452, %v451
    %v463 = vpack.c.b16 %v454, %v453
    %v464 = vpack.c.b16 %v456, %v455
    %473 = vmatprep.subr.bf16.mxu0 0
    %474 = vmatpush1.bf16.msra.mxu0 %v464
    %475 = vmatprep.subr.bf16.mxu0 0
    %476 = vmatpush1.bf16.msra.mxu0 %v463
    %477 = vmatprep.subr.bf16.mxu0 0
    %478 = vmatpush1.bf16.msra.mxu0 %v462
    %479 = vmatprep.subr.bf16.mxu0 0
    %480 = vmatpush1.bf16.msra.mxu0 %v461
    %481 = vmatprep.subr.bf16.mxu0 0
    %482 = vmatpush1.bf16.msra.mxu0 %v460
    %483 = vmatprep.subr.bf16.mxu0 0
    %484 = vmatpush1.bf16.msra.mxu0 %v459
    %485 = vmatprep.subr.bf16.mxu0 0
    %486 = vmatpush1.bf16.msra.mxu0 %v458
    %487 = vmatprep.subr.bf16.mxu0 0
    %488 = vmatpush1.bf16.msra.mxu0 %v457
    %489 = vmatprep.subr.bf16.mxu0 0
    %490 = vmatpush2.bf16.msra.mxu0 0
    %491 = vmatprep.subr.bf16.mxu0 0
    %492 = vmatpush2.bf16.msra.mxu0 0
    %493 = vmatprep.subr.bf16.mxu0 0
    %494 = vmatpush2.bf16.msra.mxu0 0
    %495 = vmatprep.subr.bf16.mxu0 0
    %496 = vmatpush2.bf16.msra.mxu0 0
    %497 = vmatprep.subr.bf16.mxu0 0
    %498 = vmatpush2.bf16.msra.mxu0 0
    %499 = vmatprep.subr.bf16.mxu0 0
    %500 = vmatpush2.bf16.msra.mxu0 0
    %501 = vmatprep.subr.bf16.mxu0 0
    %502 = vmatpush2.bf16.msra.mxu0 0
    %503 = vmatprep.subr.bf16.mxu0 0
    %504 = vmatpush2.bf16.msra.mxu0 0
    %505 = vmatprep.mubr.bf16.mxu0 0
    %506 = vmatmul.mubr.bf16.gmra.mxu0 %v409
    %v507 = vpop.f32.mrf.mxu0
    %v508 = vadd.f32 0.0, %v507
    %v509 = vpop.f32.mrf.mxu0
    %v510 = vpop.f32.mrf.mxu0
    %v511 = vadd.f32 0.0, %v510
    %v512 = vpop.f32.mrf.mxu0
    %513 = vmatprep.mubr.bf16.mxu0 0
    %514 = vmatmul.mubr.bf16.gmra.mxu0 %v410
    %v515 = vpop.f32.mrf.mxu0
    %v516 = vadd.f32 0.0, %v515
    %v517 = vpop.f32.mrf.mxu0
    %v518 = vpop.f32.mrf.mxu0
    %v519 = vadd.f32 0.0, %v518
    %v520 = vpop.f32.mrf.mxu0
    %521 = vmatprep.mubr.bf16.mxu0 0
    %522 = vmatmul.mubr.bf16.gmra.mxu0 %v411
    %v523 = vpop.f32.mrf.mxu0
    %v524 = vadd.f32 0.0, %v523
    %v525 = vpop.f32.mrf.mxu0
    %v526 = vpop.f32.mrf.mxu0
    %v527 = vadd.f32 0.0, %v526
    %v528 = vpop.f32.mrf.mxu0
    %529 = vmatprep.mubr.bf16.mxu0 0
    %530 = vmatmul.mubr.bf16.gmra.mxu0 %v412
    %v531 = vpop.f32.mrf.mxu0
    %v532 = vadd.f32 0.0, %v531
    %v533 = vpop.f32.mrf.mxu0
    %v534 = vpop.f32.mrf.mxu0
    %v535 = vadd.f32 0.0, %v534
    %v536 = vpop.f32.mrf.mxu0
    %537 = vmatprep.mubr.bf16.mxu0 0
    %538 = vmatmul.mubr.bf16.gmra.mxu0 %v413
    %v539 = vpop.f32.mrf.mxu0
    %v540 = vadd.f32 0.0, %v539
    %v541 = vpop.f32.mrf.mxu0
    %v542 = vpop.f32.mrf.mxu0
    %v543 = vadd.f32 0.0, %v542
    %v544 = vpop.f32.mrf.mxu0
    %545 = vmatprep.mubr.bf16.mxu0 0
    %546 = vmatmul.mubr.bf16.gmra.mxu0 %v414
    %v547 = vpop.f32.mrf.mxu0
    %v548 = vadd.f32 0.0, %v547
    %v549 = vpop.f32.mrf.mxu0
    %v550 = vpop.f32.mrf.mxu0
    %v551 = vadd.f32 0.0, %v550
    %v552 = vpop.f32.mrf.mxu0
    %553 = vmatprep.mubr.bf16.mxu0 0
    %554 = vmatmul.mubr.bf16.gmra.mxu0 %v415
    %v555 = vpop.f32.mrf.mxu0
    %v556 = vadd.f32 0.0, %v555
    %v557 = vpop.f32.mrf.mxu0
    %v558 = vpop.f32.mrf.mxu0
    %v559 = vadd.f32 0.0, %v558
    %v560 = vpop.f32.mrf.mxu0
    %561 = vmatprep.mubr.bf16.mxu0 0
    %562 = vmatmul.mubr.bf16.gmra.mxu0 %v416
    %v563 = vpop.f32.mrf.mxu0
    %v564 = vadd.f32 0.0, %v563
    %v565 = vpop.f32.mrf.mxu0
    %v566 = vpop.f32.mrf.mxu0
    %v567 = vadd.f32 0.0, %v566
    %v568 = vpop.f32.mrf.mxu0
    %569 = vdwg.mxu0
    %v570 = vld [vmem:[#allocation2] sm:$0xff]
    %v571 = vld [vmem:[#allocation2 + $0x8] sm:$0xff]
    %v572 = vld [vmem:[#allocation2 + $0x10] sm:$0xff]
    %v573 = vld [vmem:[#allocation2 + $0x18] sm:$0xff]
    %v574 = vld [vmem:[#allocation2 + $0x20] sm:$0xff]
    %v575 = vld [vmem:[#allocation2 + $0x28] sm:$0xff]
    %v576 = vld [vmem:[#allocation2 + $0x30] sm:$0xff]
    %v577 = vld [vmem:[#allocation2 + $0x38] sm:$0xff]
    %v578 = vld [vmem:[#allocation2 + $0x40] sm:$0xff]
    %v579 = vld [vmem:[#allocation2 + $0x48] sm:$0xff]
    %v580 = vld [vmem:[#allocation2 + $0x50] sm:$0xff]
    %v581 = vld [vmem:[#allocation2 + $0x58] sm:$0xff]
    %v582 = vld [vmem:[#allocation2 + $0x60] sm:$0xff]
    %v583 = vld [vmem:[#allocation2 + $0x68] sm:$0xff]
    %v584 = vld [vmem:[#allocation2 + $0x70] sm:$0xff]
    %v585 = vld [vmem:[#allocation2 + $0x78] sm:$0xff]
    %v586 = vld [vmem:[#allocation3] sm:$0xf]
    %v587 = vld [vmem:[#allocation3 + $0x4] sm:$0xf]
    %v588 = vld [vmem:[#allocation3 + $0x8] sm:$0xf]
    %v589 = vld [vmem:[#allocation3 + $0xc] sm:$0xf]
    %v590 = vld [vmem:[#allocation3 + $0x10] sm:$0xf]
    %v591 = vld [vmem:[#allocation3 + $0x14] sm:$0xf]
    %v592 = vld [vmem:[#allocation3 + $0x18] sm:$0xf]
    %v593 = vld [vmem:[#allocation3 + $0x1c] sm:$0xf]
    %v594 = vld [vmem:[#allocation3 + $0x20] sm:$0xf]
    %v595 = vld [vmem:[#allocation3 + $0x24] sm:$0xf]
    %v596 = vld [vmem:[#allocation3 + $0x28] sm:$0xf]
    %v597 = vld [vmem:[#allocation3 + $0x2c] sm:$0xf]
    %v598 = vld [vmem:[#allocation3 + $0x30] sm:$0xf]
    %v599 = vld [vmem:[#allocation3 + $0x34] sm:$0xf]
    %v600 = vld [vmem:[#allocation3 + $0x38] sm:$0xf]
    %v601 = vld [vmem:[#allocation3 + $0x3c] sm:$0xf]
    %v602 = vpack.c.bf16 %v511, %v508
    %v603 = vpack.c.bf16 %v519, %v516
    %v604 = vpack.c.bf16 %v527, %v524
    %v605 = vpack.c.bf16 %v535, %v532
    %v606 = vpack.c.bf16 %v543, %v540
    %v607 = vpack.c.bf16 %v551, %v548
    %v608 = vpack.c.bf16 %v559, %v556
    %v609 = vpack.c.bf16 %v567, %v564
    %v626 = vunpack.c.l.b16 %v586
    %v627 = vunpack.c.l.b16 %v587
    %v628 = vunpack.c.l.b16 %v588
    %v629 = vunpack.c.l.b16 %v589
    %v630 = vunpack.c.l.b16 %v590
    %v631 = vunpack.c.l.b16 %v591
    %v632 = vunpack.c.l.b16 %v592
    %v633 = vunpack.c.l.b16 %v593
    %v634 = vunpack.c.l.b16 %v594
    %v635 = vunpack.c.l.b16 %v595
    %v636 = vunpack.c.l.b16 %v596
    %v637 = vunpack.c.l.b16 %v597
    %v638 = vunpack.c.l.b16 %v598
    %v639 = vunpack.c.l.b16 %v599
    %v640 = vunpack.c.l.b16 %v600
    %v641 = vunpack.c.l.b16 %v601
    %v642 = vpack.c.b16 %v627, %v626
    %v643 = vpack.c.b16 %v629, %v628
    %v644 = vpack.c.b16 %v631, %v630
    %v645 = vpack.c.b16 %v633, %v632
    %v646 = vpack.c.b16 %v635, %v634
    %v647 = vpack.c.b16 %v637, %v636
    %v648 = vpack.c.b16 %v639, %v638
    %v649 = vpack.c.b16 %v641, %v640
    %658 = vmatprep.subr.bf16.mxu0 0
    %659 = vmatpush1.bf16.msra.mxu0 %v609
    %660 = vmatprep.subr.bf16.mxu0 0
    %661 = vmatpush1.bf16.msra.mxu0 %v608
    %662 = vmatprep.subr.bf16.mxu0 0
    %663 = vmatpush1.bf16.msra.mxu0 %v607
    %664 = vmatprep.subr.bf16.mxu0 0
    %665 = vmatpush1.bf16.msra.mxu0 %v606
    %666 = vmatprep.subr.bf16.mxu0 0
    %667 = vmatpush1.bf16.msra.mxu0 %v605
    %668 = vmatprep.subr.bf16.mxu0 0
    %669 = vmatpush1.bf16.msra.mxu0 %v604
    %670 = vmatprep.subr.bf16.mxu0 0
    %671 = vmatpush1.bf16.msra.mxu0 %v603
    %672 = vmatprep.subr.bf16.mxu0 0
    %673 = vmatpush1.bf16.msra.mxu0 %v602
    %674 = vmatprep.subr.bf16.mxu0 0
    %675 = vmatpush2.bf16.msra.mxu0 0
    %676 = vmatprep.subr.bf16.mxu0 0
    %677 = vmatpush2.bf16.msra.mxu0 0
    %678 = vmatprep.subr.bf16.mxu0 0
    %679 = vmatpush2.bf16.msra.mxu0 0
    %680 = vmatprep.subr.bf16.mxu0 0
    %681 = vmatpush2.bf16.msra.mxu0 0
    %682 = vmatprep.subr.bf16.mxu0 0
    %683 = vmatpush2.bf16.msra.mxu0 0
    %684 = vmatprep.subr.bf16.mxu0 0
    %685 = vmatpush2.bf16.msra.mxu0 0
    %686 = vmatprep.subr.bf16.mxu0 0
    %687 = vmatpush2.bf16.msra.mxu0 0
    %688 = vmatprep.subr.bf16.mxu0 0
    %689 = vmatpush2.bf16.msra.mxu0 0
    %690 = vmatprep.mubr.bf16.mxu0 0
    %691 = vmatmul.mubr.bf16.gmra.mxu0 %v642
    %v692 = vpop.f32.mrf.mxu0
    %v693 = vadd.f32 0.0, %v692
    %v694 = vpop.f32.mrf.mxu0
    %v695 = vpop.f32.mrf.mxu0
    %v696 = vadd.f32 0.0, %v695
    %v697 = vpop.f32.mrf.mxu0
    %698 = vmatprep.mubr.bf16.mxu0 0
    %699 = vmatmul.mubr.bf16.gmra.mxu0 %v643
    %v700 = vpop.f32.mrf.mxu0
    %v701 = vadd.f32 0.0, %v700
    %v702 = vpop.f32.mrf.mxu0
    %v703 = vpop.f32.mrf.mxu0
    %v704 = vadd.f32 0.0, %v703
    %v705 = vpop.f32.mrf.mxu0
    %706 = vmatprep.mubr.bf16.mxu0 0
    %707 = vmatmul.mubr.bf16.gmra.mxu0 %v644
    %v708 = vpop.f32.mrf.mxu0
    %v709 = vadd.f32 0.0, %v708
    %v710 = vpop.f32.mrf.mxu0
    %v711 = vpop.f32.mrf.mxu0
    %v712 = vadd.f32 0.0, %v711
    %v713 = vpop.f32.mrf.mxu0
    %714 = vmatprep.mubr.bf16.mxu0 0
    %715 = vmatmul.mubr.bf16.gmra.mxu0 %v645
    %v716 = vpop.f32.mrf.mxu0
    %v717 = vadd.f32 0.0, %v716
    %v718 = vpop.f32.mrf.mxu0
    %v719 = vpop.f32.mrf.mxu0
    %v720 = vadd.f32 0.0, %v719
    %v721 = vpop.f32.mrf.mxu0
    %722 = vmatprep.mubr.bf16.mxu0 0
    %723 = vmatmul.mubr.bf16.gmra.mxu0 %v646
    %v724 = vpop.f32.mrf.mxu0
    %v725 = vadd.f32 0.0, %v724
    %v726 = vpop.f32.mrf.mxu0
    %v727 = vpop.f32.mrf.mxu0
    %v728 = vadd.f32 0.0, %v727
    %v729 = vpop.f32.mrf.mxu0
    %730 = vmatprep.mubr.bf16.mxu0 0
    %731 = vmatmul.mubr.bf16.gmra.mxu0 %v647
    %v732 = vpop.f32.mrf.mxu0
    %v733 = vadd.f32 0.0, %v732
    %v734 = vpop.f32.mrf.mxu0
    %v735 = vpop.f32.mrf.mxu0
    %v736 = vadd.f32 0.0, %v735
    %v737 = vpop.f32.mrf.mxu0
    %738 = vmatprep.mubr.bf16.mxu0 0
    %739 = vmatmul.mubr.bf16.gmra.mxu0 %v648
    %v740 = vpop.f32.mrf.mxu0
    %v741 = vadd.f32 0.0, %v740
    %v742 = vpop.f32.mrf.mxu0
    %v743 = vpop.f32.mrf.mxu0
    %v744 = vadd.f32 0.0, %v743
    %v745 = vpop.f32.mrf.mxu0
    %746 = vmatprep.mubr.bf16.mxu0 0
    %747 = vmatmul.mubr.bf16.gmra.mxu0 %v649
    %v748 = vpop.f32.mrf.mxu0
    %v749 = vadd.f32 0.0, %v748
    %v750 = vpop.f32.mrf.mxu0
    %v751 = vpop.f32.mrf.mxu0
    %v752 = vadd.f32 0.0, %v751
    %v753 = vpop.f32.mrf.mxu0
    %754 = vdwg.mxu0
    %v755 = vadd.f32 %v570, %v693
    %v756 = vadd.f32 %v571, %v696
    %v757 = vadd.f32 %v572, %v701
    %v758 = vadd.f32 %v573, %v704
    %v759 = vadd.f32 %v574, %v709
    %v760 = vadd.f32 %v575, %v712
    %v761 = vadd.f32 %v576, %v717
    %v762 = vadd.f32 %v577, %v720
    %v763 = vadd.f32 %v578, %v725
    %v764 = vadd.f32 %v579, %v728
    %v765 = vadd.f32 %v580, %v733
    %v766 = vadd.f32 %v581, %v736
    %v767 = vadd.f32 %v582, %v741
    %v768 = vadd.f32 %v583, %v744
    %v769 = vadd.f32 %v584, %v749
    %v770 = vadd.f32 %v585, %v752
    %771 = vst [vmem:[#allocation2] sm:$0xff] %v755
    %772 = vst [vmem:[#allocation2 + $0x8] sm:$0xff] %v756
    %773 = vst [vmem:[#allocation2 + $0x10] sm:$0xff] %v757
    %774 = vst [vmem:[#allocation2 + $0x18] sm:$0xff] %v758
    %775 = vst [vmem:[#allocation2 + $0x20] sm:$0xff] %v759
    %776 = vst [vmem:[#allocation2 + $0x28] sm:$0xff] %v760
    %777 = vst [vmem:[#allocation2 + $0x30] sm:$0xff] %v761
    %778 = vst [vmem:[#allocation2 + $0x38] sm:$0xff] %v762
    %779 = vst [vmem:[#allocation2 + $0x40] sm:$0xff] %v763
    %780 = vst [vmem:[#allocation2 + $0x48] sm:$0xff] %v764
    %781 = vst [vmem:[#allocation2 + $0x50] sm:$0xff] %v765
    %782 = vst [vmem:[#allocation2 + $0x58] sm:$0xff] %v766
    %783 = vst [vmem:[#allocation2 + $0x60] sm:$0xff] %v767
    %784 = vst [vmem:[#allocation2 + $0x68] sm:$0xff] %v768
    %785 = vst [vmem:[#allocation2 + $0x70] sm:$0xff] %v769
    %786 = vst [vmem:[#allocation2 + $0x78] sm:$0xff] %v770
    // Predicated region
    $region50: #{tpu_custom_call.1} parent=1 // pred_check
      %p787 = pneg %p93
    $region51: #{tpu_custom_call.1} parent=1 // pred_check_branch
      %789 = sbr.rel (%p787) target = $region53
    $region52: #{tpu_custom_call.1} parent=1 // pred_region
      %v790 = vld [vmem:[#allocation2] sm:$0xff]
      %v791 = vld [vmem:[#allocation2 + $0x8] sm:$0xff]
      %v792 = vld [vmem:[#allocation2 + $0x10] sm:$0xff]
      %v793 = vld [vmem:[#allocation2 + $0x18] sm:$0xff]
      %v794 = vld [vmem:[#allocation2 + $0x20] sm:$0xff]
      %v795 = vld [vmem:[#allocation2 + $0x28] sm:$0xff]
      %v796 = vld [vmem:[#allocation2 + $0x30] sm:$0xff]
      %v797 = vld [vmem:[#allocation2 + $0x38] sm:$0xff]
      %v798 = vld [vmem:[#allocation2 + $0x40] sm:$0xff]
      %v799 = vld [vmem:[#allocation2 + $0x48] sm:$0xff]
      %v800 = vld [vmem:[#allocation2 + $0x50] sm:$0xff]
      %v801 = vld [vmem:[#allocation2 + $0x58] sm:$0xff]
      %v802 = vld [vmem:[#allocation2 + $0x60] sm:$0xff]
      %v803 = vld [vmem:[#allocation2 + $0x68] sm:$0xff]
      %v804 = vld [vmem:[#allocation2 + $0x70] sm:$0xff]
      %v805 = vld [vmem:[#allocation2 + $0x78] sm:$0xff]
      %v806 = vmax.f32 %v790, 0.0
      %v807 = vmax.f32 %v791, 0.0
      %v808 = vmax.f32 %v792, 0.0
      %v809 = vmax.f32 %v793, 0.0
      %v810 = vmax.f32 %v794, 0.0
      %v811 = vmax.f32 %v795, 0.0
      %v812 = vmax.f32 %v796, 0.0
      %v813 = vmax.f32 %v797, 0.0
      %v814 = vmax.f32 %v798, 0.0
      %v815 = vmax.f32 %v799, 0.0
      %v816 = vmax.f32 %v800, 0.0
      %v817 = vmax.f32 %v801, 0.0
      %v818 = vmax.f32 %v802, 0.0
      %v819 = vmax.f32 %v803, 0.0
      %v820 = vmax.f32 %v804, 0.0
      %v821 = vmax.f32 %v805, 0.0
      %822 = vst [vmem:[#allocation12] sm:$0xff] %v806
      %823 = vst [vmem:[#allocation12 + $0x8] sm:$0xff] %v807
      %824 = vst [vmem:[#allocation12 + $0x10] sm:$0xff] %v808
      %825 = vst [vmem:[#allocation12 + $0x18] sm:$0xff] %v809
      %826 = vst [vmem:[#allocation12 + $0x20] sm:$0xff] %v810
      %827 = vst [vmem:[#allocation12 + $0x28] sm:$0xff] %v811
      %828 = vst [vmem:[#allocation12 + $0x30] sm:$0xff] %v812
      %829 = vst [vmem:[#allocation12 + $0x38] sm:$0xff] %v813
      %830 = vst [vmem:[#allocation12 + $0x40] sm:$0xff] %v814
      %831 = vst [vmem:[#allocation12 + $0x48] sm:$0xff] %v815
      %832 = vst [vmem:[#allocation12 + $0x50] sm:$0xff] %v816
      %833 = vst [vmem:[#allocation12 + $0x58] sm:$0xff] %v817
      %834 = vst [vmem:[#allocation12 + $0x60] sm:$0xff] %v818
      %835 = vst [vmem:[#allocation12 + $0x68] sm:$0xff] %v819
      %836 = vst [vmem:[#allocation12 + $0x70] sm:$0xff] %v820
      %837 = vst [vmem:[#allocation12 + $0x78] sm:$0xff] %v821
    $region53: #{tpu_custom_call.1} parent=1 // pred_fallthru
      _
    // Predicated region
    $region54: #{tpu_custom_call.1} parent=1 // pred_check
      _
    $region55: #{tpu_custom_call.1} parent=1 // pred_check_branch
      %839 = sbr.rel (0) target = $region57
    $region56: #{tpu_custom_call.1} parent=1 // pred_region
      %s841 = ssub.s32 2048, 2048
      %842 = vsyncadd [#allocation5], %s841
      %s843 = sshll.u32 [#allocation12], 4
      %s844 = int_to_ptr.vmem [resolvable:$true] %s843
      %849 = dma.vmem_to_hbm [thread:$0]  %s844, 2048, %s6, [#allocation5], 128, 128, 8
    $region57: #{tpu_custom_call.1} parent=1 // pred_fallthru
      _
    // Predicated region
    $region58: #{tpu_custom_call.1} parent=1 // pred_check
      _
    $region59: #{tpu_custom_call.1} parent=1 // pred_check_branch
      %851 = sbr.rel (0) target = $region61
    $region60: #{tpu_custom_call.1} parent=1 // pred_region
      %852 = dma.done [#allocation5], 2048
    $region61: #{tpu_custom_call.1} parent=1 // pred_fallthru
      _
    %853 = vsyncpa [#allocation4], 1
    %854 = vsyncpa [#allocation7], 1
    %855 = vsyncpa [#allocation10], 1
    %856 = vsyncpa [#allocation5], 1

</llo_original>
